<compile_context>
chip_gen: v5e
topology: v5e:2x2
jax: 0.10.0
libtpu: 0.0.40
codegen_flags: <defaults>
</compile_context>

<pallas_src>
import functools

import jax
import jax.numpy as jnp
import numpy as np
from jax.experimental import pallas as pl
from jax.experimental.pallas import tpu as pltpu


def gaussian_kernel(kernel_size=7, sig=1.0):
    """Exact copy of the reference numpy helper (unnormalized 2D gaussian)."""
    center = (kernel_size // 2,)
    x_axis = np.linspace(0, kernel_size - 1, kernel_size) - center
    y_axis = np.linspace(0, kernel_size - 1, kernel_size) - center
    xx, yy = np.meshgrid(x_axis, y_axis)
    kernel = np.exp(-0.5 * (np.square(xx) + np.square(yy)) / np.square(sig)) \
        / (np.sqrt(2 * np.pi) * sig)
    return kernel


def _round_up(x, m):
    return ((x + m - 1) // m) * m


def _l_spa_kernel(K, Hp, gy, gx, org_ref, enh_ref, out_ref):
    """org/enh: (bt, H_pad, W_pad) native dtype  ->  out: (bt, He_pad, We_pad) f32."""
    W = org_ref.shape[2]           # padded, multiple of 128
    He = out_ref.shape[1]          # padded, multiple of 8
    We = out_ref.shape[2]          # padded, multiple of 128
    f32 = jnp.float32

    # ---- Gaussian row pass (sublane shifts); difference fused via linearity ----
    rows = None
    for u in range(K):
        d_u = (org_ref[:, u:u + Hp, :].astype(f32)
               - enh_ref[:, u:u + Hp, :].astype(f32))
        rows = gy[u] * d_u if rows is None else rows + gy[u] * d_u
    # rows: (bt, Hp, W) with Hp = He + 2

    # ---- Gaussian column pass: lane shifts on the XLU, keep full lane width ----
    q = gx[0] * rows
    for v in range(1, K):
        # roll by (W - v)  <=>  q[..., j] += gx[v] * rows[..., j + v]
        q = q + gx[v] * pltpu.roll(rows, W - v, axis=2)
    # q[b, r, j] == pooled difference P[r, j] for every kept (r, j)

    # ---- Four first-difference direction kernels (lane rolls + sublane slices) ----
    q1 = pltpu.roll(q, W - 1, axis=2)   # q1[..., j] = P[., j+1]
    q2 = pltpu.roll(q, W - 2, axis=2)   # q2[..., j] = P[., j+2]

    c = q1[:, 1:1 + He, :]              # P[i+1, j+1]  (center)
    dl = c - q[:, 1:1 + He, :]          # - P[i+1, j]      (left)
    dr = c - q2[:, 1:1 + He, :]         # - P[i+1, j+2]    (right)
    du = c - q1[:, 0:He, :]             # - P[i,   j+1]    (up)
    dd = c - q1[:, 2:2 + He, :]         # - P[i+2, j+1]    (down)

    e = dl * dl + dr * dr + du * du + dd * dd        # (bt, He, W)
    # Offset-0, 128-multiple lane slice -> unmasked, lane-dense stores.
    out_ref[...] = e[:, :, 0:We].astype(out_ref.dtype)


def _vmem_phys_bytes():
    """Generation-aware physical VMEM query with a conservative fallback."""
    try:
        info = pltpu.get_tpu_info()
        v = getattr(info, "vmem_capacity_bytes", None)
        if v:
            return int(v)
    except Exception:
        pass
    return 64 << 20   # v7x per-TensorCore VMEM (safe lower bound everywhere)


def _choose_block_bc(bc, per_slice_bytes, budget_bytes):
    """Largest divisor of bc fitting the budget, preferring >=4 grid steps
    (double buffering on both v7x cores), then >=2, then any fitting divisor."""
    divs = [d for d in range(1, bc + 1) if bc % d == 0]
    fitting = [d for d in divs if d * per_slice_bytes <= budget_bytes] or [1]
    for steps in (4, 2):
        ok = [d for d in fitting if bc // d >= steps]
        if ok:
            return max(ok)
    return max(fitting)


def l_spa(enhance, org, pool_kernel_size):
    """enhance, org: (B, 3, H, W). Returns E of shape (B, 3, H-K-1, W-K-1), f32."""
    B, C, H, W = org.shape
    assert enhance.shape == org.shape
    K = int(pool_kernel_size)
    He, We = H - K - 1, W - K - 1       # gaussian valid conv then 3x3 valid conv
    assert He > 0 and We > 0, "image too small for pooling + 3x3 valid conv"

    # Exact separable factors of gaussian_kernel(K, K/4):
    #   kernel[u, v] = exp(-0.5*(u-c)^2/sig^2) * exp(-0.5*(v-c)^2/sig^2) / (sqrt(2*pi)*sig)
    sig = K / 4.0
    cidx = K // 2
    ax = np.arange(K, dtype=np.float64) - cidx
    g1 = np.exp(-0.5 * np.square(ax) / (sig * sig))
    norm = 1.0 / (np.sqrt(2.0 * np.pi) * sig)
    gy = tuple(float(v) for v in g1)            # row factor
    gx = tuple(float(v * norm) for v in g1)     # col factor (carries the norm)

    # Lane/sublane-dense padded geometry (pad in wrapper, crop after the call).
    He_pad = _round_up(He, 8)
    We_pad = _round_up(We, 128)
    H_pad = _round_up(He_pad + K + 1, 8)
    W_pad = _round_up(We_pad + K + 1, 128)
    Hp = He_pad + 2                              # pooled rows computed in-kernel

    BC = B * C
    org3 = org.reshape(BC, H, W)                 # native dtype: no wrapper upcast
    enh3 = enhance.reshape(BC, H, W)
    if H_pad != H or W_pad != W:
        cfg = ((0, 0), (0, H_pad - H), (0, W_pad - W))
        org3 = jnp.pad(org3, cfg)
        enh3 = jnp.pad(enh3, cfg)

    # VMEM model: double-buffered DMA windows + live f32 intermediates.
    in_item = jnp.dtype(org.dtype).itemsize
    per_slice = (2 * 2 * H_pad * W_pad * in_item     # org + enh windows, x2 buffers
                 + 2 * He_pad * We_pad * 4           # output window, x2 buffers
                 + 8 * Hp * W_pad * 4)               # rows/q/q1/q2/diffs/E live temps
    phys = _vmem_phys_bytes()
    budget = max(8 << 20, int(phys * 0.40))
    bt = _choose_block_bc(BC, per_slice, budget)
    vmem_limit = int(min(phys, max(32 << 20, bt * per_slice + (8 << 20))))
    # TODO(synk): fall back to H-strip (halo) spatial tiling when B*C is tiny or a
    # single (1, H, W) slice plus intermediates would exceed the VMEM budget.

    out = pl.pallas_call(
        functools.partial(_l_spa_kernel, K, Hp, gy, gx),
        out_shape=jax.ShapeDtypeStruct((BC, He_pad, We_pad), jnp.float32),
        grid=(BC // bt,),
        in_specs=[pl.BlockSpec((bt, H_pad, W_pad), lambda i: (i, 0, 0)),
                  pl.BlockSpec((bt, H_pad, W_pad), lambda i: (i, 0, 0))],
        out_specs=pl.BlockSpec((bt, He_pad, We_pad), lambda i: (i, 0, 0)),
        compiler_params=pltpu.CompilerParams(
            dimension_semantics=("parallel",),
            vmem_limit_bytes=vmem_limit),
    )(org3, enh3)

    return out[:, :He, :We].reshape(B, C, He, We)


# ----------------------------- pure-JAX reference -----------------------------
def _ref_l_spa(enhance, org, K):
    """Literal transcription of the PyTorch forward (XLA convs, NCHW, groups=C)."""
    g2d = jnp.asarray(gaussian_kernel(K, K / 4.0), dtype=jnp.float32)
    C = org.shape[1]

    def dwconv(x, k):
        kh, kw = k.shape
        w = jnp.broadcast_to(k[None, None], (C, 1, kh, kw))
        return jax.lax.conv_general_dilated(
            x, w, window_strides=(1, 1), padding='VALID',
            dimension_numbers=('NCHW', 'OIHW', 'NCHW'),
            feature_group_count=C)

    org_pool = dwconv(org.astype(jnp.float32), g2d)
    enh_pool = dwconv(enhance.astype(jnp.float32), g2d)

    kl = jnp.array([[0, 0, 0], [-1, 1, 0], [0, 0, 0]], jnp.float32)
    kr = jnp.array([[0, 0, 0], [0, 1, -1], [0, 0, 0]], jnp.float32)
    ku = jnp.array([[0, -1, 0], [0, 1, 0], [0, 0, 0]], jnp.float32)
    kd = jnp.array([[0, 0, 0], [0, 1, 0], [0, -1, 0]], jnp.float32)

    E = None
    for k in (kl, kr, ku, kd):
        D = (dwconv(org_pool, k) - dwconv(enh_pool, k)) ** 2
        E = D if E is None else E + D
    return E


if __name__ == "__main__":
    key = jax.random.PRNGKey(0)
    B, C, H, W = 2, 3, 16, 16          # module hard-codes 3 channels (RGB)
    pool_kernel_size = 4

    k1, k2 = jax.random.split(key)
    enhance = jax.random.uniform(k1, (B, C, H, W), dtype=jnp.float32)
    org = jax.random.uniform(k2, (B, C, H, W), dtype=jnp.float32)

    l_spa_fn = jax.jit(l_spa, static_argnums=2)
    E = jax.block_until_ready(l_spa_fn(enhance, org, pool_kernel_size))
    E_ref = jax.block_until_ready(_ref_l_spa(enhance, org, pool_kernel_size))

    assert E.shape == E_ref.shape, (E.shape, E_ref.shape)
    err = float(jnp.max(jnp.abs(E - E_ref)))
    scale_v = float(jnp.max(jnp.abs(E_ref))) + 1e-6
    assert err <= 1e-3 * scale_v + 1e-5, (err, scale_v)
    print("KERNEL_OK")
</pallas_src>

<mosaic_0001>
module attributes {stable_mosaic.version = 11 : i64} {
  func.func @_l_spa_kernel(%arg0: i32, %arg1: memref<1x24x256xf32, #tpu.memory_space<vmem>>, %arg2: memref<1x24x256xf32, #tpu.memory_space<vmem>>, %arg3: memref<1x16x128xf32, #tpu.memory_space<vmem>>) attributes {dimension_semantics = [#tpu.dimension_semantics<parallel>], iteration_bounds = array<i64: 6>, scalar_prefetch = 0 : i64, scratch_operands = 0 : i64, tpu.core_type = #tpu.core_type<tc>, window_params = [{transform_indices = @transform_0, window_bounds = array<i64: 1, 24, 256>}, {transform_indices = @transform_1, window_bounds = array<i64: 1, 24, 256>}, {transform_indices = @transform_2, window_bounds = array<i64: 1, 16, 128>}]} {
    %c0 = arith.constant 0 : index
    %c0_0 = arith.constant 0 : index
    %c0_1 = arith.constant 0 : index
    %0 = vector.load %arg1[%c0, %c0_0, %c0_1] : memref<1x24x256xf32, #tpu.memory_space<vmem>>, vector<1x18x256xf32>
    %c0_2 = arith.constant 0 : index
    %c0_3 = arith.constant 0 : index
    %c0_4 = arith.constant 0 : index
    %1 = vector.load %arg2[%c0_2, %c0_3, %c0_4] : memref<1x24x256xf32, #tpu.memory_space<vmem>>, vector<1x18x256xf32>
    %2 = arith.subf %0, %1 : vector<1x18x256xf32>
    %cst = arith.constant 0.135335281 : f32
    %3 = vector.broadcast %cst : f32 to vector<1x18x256xf32>
    %4 = arith.mulf %3, %2 : vector<1x18x256xf32>
    %c0_5 = arith.constant 0 : index
    %c1 = arith.constant 1 : index
    %c0_6 = arith.constant 0 : index
    %5 = vector.load %arg1[%c0_5, %c1, %c0_6] : memref<1x24x256xf32, #tpu.memory_space<vmem>>, vector<1x18x256xf32>
    %c0_7 = arith.constant 0 : index
    %c1_8 = arith.constant 1 : index
    %c0_9 = arith.constant 0 : index
    %6 = vector.load %arg2[%c0_7, %c1_8, %c0_9] : memref<1x24x256xf32, #tpu.memory_space<vmem>>, vector<1x18x256xf32>
    %7 = arith.subf %5, %6 : vector<1x18x256xf32>
    %cst_10 = arith.constant 0.606530666 : f32
    %8 = vector.broadcast %cst_10 : f32 to vector<1x18x256xf32>
    %9 = arith.mulf %8, %7 : vector<1x18x256xf32>
    %10 = arith.addf %4, %9 : vector<1x18x256xf32>
    %c0_11 = arith.constant 0 : index
    %c2 = arith.constant 2 : index
    %c0_12 = arith.constant 0 : index
    %11 = vector.load %arg1[%c0_11, %c2, %c0_12] : memref<1x24x256xf32, #tpu.memory_space<vmem>>, vector<1x18x256xf32>
    %c0_13 = arith.constant 0 : index
    %c2_14 = arith.constant 2 : index
    %c0_15 = arith.constant 0 : index
    %12 = vector.load %arg2[%c0_13, %c2_14, %c0_15] : memref<1x24x256xf32, #tpu.memory_space<vmem>>, vector<1x18x256xf32>
    %13 = arith.subf %11, %12 : vector<1x18x256xf32>
    %cst_16 = arith.constant 1.000000e+00 : f32
    %14 = vector.broadcast %cst_16 : f32 to vector<1x18x256xf32>
    %15 = arith.mulf %14, %13 : vector<1x18x256xf32>
    %16 = arith.addf %10, %15 : vector<1x18x256xf32>
    %c0_17 = arith.constant 0 : index
    %c3 = arith.constant 3 : index
    %c0_18 = arith.constant 0 : index
    %17 = vector.load %arg1[%c0_17, %c3, %c0_18] : memref<1x24x256xf32, #tpu.memory_space<vmem>>, vector<1x18x256xf32>
    %c0_19 = arith.constant 0 : index
    %c3_20 = arith.constant 3 : index
    %c0_21 = arith.constant 0 : index
    %18 = vector.load %arg2[%c0_19, %c3_20, %c0_21] : memref<1x24x256xf32, #tpu.memory_space<vmem>>, vector<1x18x256xf32>
    %19 = arith.subf %17, %18 : vector<1x18x256xf32>
    %cst_22 = arith.constant 0.606530666 : f32
    %20 = vector.broadcast %cst_22 : f32 to vector<1x18x256xf32>
    %21 = arith.mulf %20, %19 : vector<1x18x256xf32>
    %22 = arith.addf %16, %21 : vector<1x18x256xf32>
    %cst_23 = arith.constant 0.0539909676 : f32
    %23 = vector.broadcast %cst_23 : f32 to vector<1x18x256xf32>
    %24 = arith.mulf %23, %22 : vector<1x18x256xf32>
    %c255_i32 = arith.constant 255 : i32
    %25 = tpu.dynamic_rotate %22 by %c255_i32 dim 2 : vector<1x18x256xf32>, i32 -> vector<1x18x256xf32>
    %cst_24 = arith.constant 0.241970718 : f32
    %26 = vector.broadcast %cst_24 : f32 to vector<1x18x256xf32>
    %27 = arith.mulf %26, %25 : vector<1x18x256xf32>
    %28 = arith.addf %24, %27 : vector<1x18x256xf32>
    %c254_i32 = arith.constant 254 : i32
    %29 = tpu.dynamic_rotate %22 by %c254_i32 dim 2 : vector<1x18x256xf32>, i32 -> vector<1x18x256xf32>
    %cst_25 = arith.constant 0.398942292 : f32
    %30 = vector.broadcast %cst_25 : f32 to vector<1x18x256xf32>
    %31 = arith.mulf %30, %29 : vector<1x18x256xf32>
    %32 = arith.addf %28, %31 : vector<1x18x256xf32>
    %c253_i32 = arith.constant 253 : i32
    %33 = tpu.dynamic_rotate %22 by %c253_i32 dim 2 : vector<1x18x256xf32>, i32 -> vector<1x18x256xf32>
    %cst_26 = arith.constant 0.241970718 : f32
    %34 = vector.broadcast %cst_26 : f32 to vector<1x18x256xf32>
    %35 = arith.mulf %34, %33 : vector<1x18x256xf32>
    %36 = arith.addf %32, %35 : vector<1x18x256xf32>
    %c255_i32_27 = arith.constant 255 : i32
    %37 = tpu.dynamic_rotate %36 by %c255_i32_27 dim 2 : vector<1x18x256xf32>, i32 -> vector<1x18x256xf32>
    %c254_i32_28 = arith.constant 254 : i32
    %38 = tpu.dynamic_rotate %36 by %c254_i32_28 dim 2 : vector<1x18x256xf32>, i32 -> vector<1x18x256xf32>
    %39 = vector.extract_strided_slice %37 {offsets = [0, 1, 0], sizes = [1, 16, 256], strides = [1, 1, 1]} : vector<1x18x256xf32> to vector<1x16x256xf32>
    %40 = vector.extract_strided_slice %36 {offsets = [0, 1, 0], sizes = [1, 16, 256], strides = [1, 1, 1]} : vector<1x18x256xf32> to vector<1x16x256xf32>
    %41 = arith.subf %39, %40 : vector<1x16x256xf32>
    %42 = vector.extract_strided_slice %38 {offsets = [0, 1, 0], sizes = [1, 16, 256], strides = [1, 1, 1]} : vector<1x18x256xf32> to vector<1x16x256xf32>
    %43 = arith.subf %39, %42 : vector<1x16x256xf32>
    %44 = vector.extract_strided_slice %37 {offsets = [0, 0, 0], sizes = [1, 16, 256], strides = [1, 1, 1]} : vector<1x18x256xf32> to vector<1x16x256xf32>
    %45 = arith.subf %39, %44 : vector<1x16x256xf32>
    %46 = vector.extract_strided_slice %37 {offsets = [0, 2, 0], sizes = [1, 16, 256], strides = [1, 1, 1]} : vector<1x18x256xf32> to vector<1x16x256xf32>
    %47 = arith.subf %39, %46 : vector<1x16x256xf32>
    %48 = arith.mulf %41, %41 : vector<1x16x256xf32>
    %49 = arith.mulf %43, %43 : vector<1x16x256xf32>
    %50 = arith.addf %48, %49 : vector<1x16x256xf32>
    %51 = arith.mulf %45, %45 : vector<1x16x256xf32>
    %52 = arith.addf %50, %51 : vector<1x16x256xf32>
    %53 = arith.mulf %47, %47 : vector<1x16x256xf32>
    %54 = arith.addf %52, %53 : vector<1x16x256xf32>
    %55 = vector.extract_strided_slice %54 {offsets = [0, 0, 0], sizes = [1, 16, 128], strides = [1, 1, 1]} : vector<1x16x256xf32> to vector<1x16x128xf32>
    %c0_29 = arith.constant 0 : index
    %c0_30 = arith.constant 0 : index
    %c0_31 = arith.constant 0 : index
    %56 = vector.load %arg3[%c0_29, %c0_30, %c0_31] : memref<1x16x128xf32, #tpu.memory_space<vmem>>, vector<1x16x128xf32>
    tpu.vector_store %arg3[%c0_29, %c0_30, %c0_31], %55 {strides = array<i32>} : memref<1x16x128xf32, #tpu.memory_space<vmem>>, vector<1x16x128xf32>,
    return
  }
  func.func @transform_0(%arg0: i32) -> (i32, i32, i32) {
    %c0_i32 = arith.constant 0 : i32
    %c0_i32_0 = arith.constant 0 : i32
    %c0_i32_1 = arith.constant 0 : i32
    return %arg0, %c0_i32, %c0_i32_0 : i32, i32, i32
  }
  func.func @transform_1(%arg0: i32) -> (i32, i32, i32) {
    %c0_i32 = arith.constant 0 : i32
    %c0_i32_0 = arith.constant 0 : i32
    %c0_i32_1 = arith.constant 0 : i32
    return %arg0, %c0_i32, %c0_i32_0 : i32, i32, i32
  }
  func.func @transform_2(%arg0: i32) -> (i32, i32, i32) {
    %c0_i32 = arith.constant 0 : i32
    %c0_i32_0 = arith.constant 0 : i32
    %c0_i32_1 = arith.constant 0 : i32
    return %arg0, %c0_i32, %c0_i32_0 : i32, i32, i32
  }
}

</mosaic_0001>

<llo_original>
// kernel: l_spa.1
$region0: #{l_spa.1}
  #allocation0 [shape = 'u32[]', space=smem, size = 0x4, offset = 0x4, fixed_abs, tag = 'smem constant byte address 0x4 - core index']
  #allocation1 [shape = 'u32[72,128]{1,0:T(1,128)}', space=vmem, size = 0x9000, scoped, tag = 'internal scratch']
  %s0 = inlined_call_operand.vmem [shape: f32[6,24,256], index: 0, kind: input, shape index: {}]
  %s1 = inlined_call_operand.vmem [shape: f32[6,24,256], index: 1, kind: input, shape index: {}]
  %s2 = inlined_call_operand.vmem [shape: f32[6,16,128], index: 2, kind: output, shape index: {}]
  %s3 = sld [smem:[#allocation0]]
  $region41: #{l_spa.1} parent=0
    _
  %s5 = ssub.s32 1, %s3
  %s6 = scalar_select 0, %s5, %s3
  loop: start=0, step=1, limit=8
  $region2: #{l_spa.1} parent=0 // loop_pre_header
    _
  $region3: #{l_spa.1} parent=0 // loop_header
    %s8 = sphi 0, %s12
    %p9 = scmp.ge.s32.totalorder %s8, 8
    %s18 = sphi 0, %s20
    %s21 = sphi 0, %s18
    %s22 = sphi 0, %s21
    %s38 = sphi 0, %s22
    %s44 = sphi 0, %s46
    %s47 = sphi 0, %s44
    %s48 = sphi 0, %s47
    %s64 = sphi 0, %s48
    %s70 = sphi 0, %s72
    %s73 = sphi 0, %s70
    %s74 = sphi 0, %s73
    %s90 = sphi 0, %s74
  $region4: #{l_spa.1} parent=0 // loop_header_branch
    %11 = sbr.rel (%p9) target = $region8
  $region5: #{l_spa.1} parent=0 // loop_body
    %s13 = ssub.s32 %s8, 1
    %s14 = ssub.s32 %s8, 2
    %s15 = sadd.s32 %s8, 1
    %s16 = ssub.s32 %s8, %s15
    %p17 = scmp.eq.s32.totalorder %s16, 0
    %s19 = sadd.s32 %s18, 1
    %s20 = scalar_select %p17, %s18, %s19
    %p23 = pneg %p17
    %p24 = scmp.eq.s32.totalorder %s8, 5
    %p25 = por %p23, %p24
    %p26 = scmp.ne.s32.totalorder %s18, %s21
    %p27 = scmp.eq.s32.totalorder %s8, 0
    %p28 = por %p26, %p27
    %p29 = scmp.ne.s32.totalorder %s18, %s21
    %p30 = scmp.eq.s32.totalorder %s13, 5
    %p31 = por %p29, %p30
    %p32 = scmp.ne.s32.totalorder %s21, %s22
    %p33 = scmp.eq.s32.totalorder %s13, 0
    %p34 = por %p32, %p33
    %p35 = scmp.ne.s32.totalorder %s21, %s22
    %p36 = scmp.eq.s32.totalorder %s14, 5
    %p37 = por %p35, %p36
    %p39 = scmp.ne.s32.totalorder %s22, %s38
    %p40 = scmp.eq.s32.totalorder %s14, 0
    %p41 = por %p39, %p40
    %s42 = ssub.s32 %s8, %s15
    %p43 = scmp.eq.s32.totalorder %s42, 0
    %s45 = sadd.s32 %s44, 1
    %s46 = scalar_select %p43, %s44, %s45
    %p49 = pneg %p43
    %p50 = scmp.eq.s32.totalorder %s8, 5
    %p51 = por %p49, %p50
    %p52 = scmp.ne.s32.totalorder %s44, %s47
    %p53 = scmp.eq.s32.totalorder %s8, 0
    %p54 = por %p52, %p53
    %p55 = scmp.ne.s32.totalorder %s44, %s47
    %p56 = scmp.eq.s32.totalorder %s13, 5
    %p57 = por %p55, %p56
    %p58 = scmp.ne.s32.totalorder %s47, %s48
    %p59 = scmp.eq.s32.totalorder %s13, 0
    %p60 = por %p58, %p59
    %p61 = scmp.ne.s32.totalorder %s47, %s48
    %p62 = scmp.eq.s32.totalorder %s14, 5
    %p63 = por %p61, %p62
    %p65 = scmp.ne.s32.totalorder %s48, %s64
    %p66 = scmp.eq.s32.totalorder %s14, 0
    %p67 = por %p65, %p66
    %s68 = ssub.s32 %s8, %s15
    %p69 = scmp.eq.s32.totalorder %s68, 0
    %s71 = sadd.s32 %s70, 1
    %s72 = scalar_select %p69, %s70, %s71
    %p75 = pneg %p69
    %p76 = scmp.eq.s32.totalorder %s8, 5
    %p77 = por %p75, %p76
    %p78 = scmp.ne.s32.totalorder %s70, %s73
    %p79 = scmp.eq.s32.totalorder %s8, 0
    %p80 = por %p78, %p79
    %p81 = scmp.ne.s32.totalorder %s70, %s73
    %p82 = scmp.eq.s32.totalorder %s13, 5
    %p83 = por %p81, %p82
    %p84 = scmp.ne.s32.totalorder %s73, %s74
    %p85 = scmp.eq.s32.totalorder %s13, 0
    %p86 = por %p84, %p85
    %p87 = scmp.ne.s32.totalorder %s73, %s74
    %p88 = scmp.eq.s32.totalorder %s14, 5
    %p89 = por %p87, %p88
    %p91 = scmp.ne.s32.totalorder %s74, %s90
    %p92 = scmp.eq.s32.totalorder %s14, 0
    %p93 = por %p91, %p92
    %p94 = scmp.le.s32.totalorder 1, %s8
    %p95 = scmp.lt.s32.totalorder %s8, 7
    %p96 = pnand %p94, %p95
    %p97 = pneg %p96
    // Predicated region
    $region9: #{l_spa.1} parent=5 // pred_check
      _
    $region10: #{l_spa.1} parent=5 // pred_check_branch
      %99 = sbr.rel (%p96) target = $region12
    $region11: #{l_spa.1} parent=5 // pred_region
      %s100 = ssub.s32 %s8, 1
    $region12: #{l_spa.1} parent=5 // pred_fallthru
      _
    %p101 = scmp.lt.s32.totalorder %s8, 6
    // Predicated region
    $region13: #{l_spa.1} parent=5 // pred_check
      %p102 = pneg %p101
    $region14: #{l_spa.1} parent=5 // pred_check_branch
      %104 = sbr.rel (%p102) target = $region16
    $region15: #{l_spa.1} parent=5 // pred_region
      // Predicated region
      $region17: #{l_spa.1} parent=15 // pred_check
        %p105 = pneg %p28
      $region18: #{l_spa.1} parent=15 // pred_check_branch
        %107 = sbr.rel (%p105) target = $region20
      $region19: #{l_spa.1} parent=15 // pred_region
        %p108 = scmp.lt.s32.totalorder %s8, 5
        %s109 = scalar_select %p108, %s8, 5
        %s110 = smul.addr %s109, 6
        %s111 = smul.addr %s110, 8
        %s112 = scalar_lea.vmem %s0, %s111
      $region20: #{l_spa.1} parent=15 // pred_fallthru
        _
      // Predicated region
      $region21: #{l_spa.1} parent=15 // pred_check
        %p113 = pneg %p54
      $region22: #{l_spa.1} parent=15 // pred_check_branch
        %115 = sbr.rel (%p113) target = $region24
      $region23: #{l_spa.1} parent=15 // pred_region
        %p116 = scmp.lt.s32.totalorder %s8, 5
        %s117 = scalar_select %p116, %s8, 5
        %s118 = smul.addr %s117, 6
        %s119 = smul.addr %s118, 8
        %s120 = scalar_lea.vmem %s1, %s119
      $region24: #{l_spa.1} parent=15 // pred_fallthru
        _
    $region16: #{l_spa.1} parent=5 // pred_fallthru
      _
    %p121 = scmp.le.s32.totalorder 1, %s8
    %p122 = scmp.lt.s32.totalorder %s8, 7
    %p123 = pnand %p121, %p122
    %p124 = pneg %p123
    // Predicated region
    $region25: #{l_spa.1} parent=5 // pred_check
      _
    $region26: #{l_spa.1} parent=5 // pred_check_branch
      %126 = sbr.rel (%p123) target = $region28
    $region27: #{l_spa.1} parent=5 // pred_region
      %s127 = ssub.s32 %s8, 1
      %p128 = scmp.lt.s32.totalorder %s13, 5
      %s129 = scalar_select %p128, %s13, 5
      %s130 = smul.addr %s129, 6
      %s131 = smul.addr %s130, 8
      %s132 = scalar_lea.vmem %s0, %s131
      %p133 = pneg %p34
      %p134 = pneg %p31
      %p135 = scmp.lt.s32.totalorder %s13, 5
      %s136 = scalar_select %p135, %s13, 5
      %s137 = smul.addr %s136, 6
      %s138 = smul.addr %s137, 8
      %s139 = scalar_lea.vmem %s1, %s138
      %p140 = pneg %p60
      %p141 = pneg %p57
      %p142 = pneg %p86
      %p143 = pneg %p83
      %p144 = scmp.lt.s32.totalorder %s13, 5
      %s145 = scalar_select %p144, %s13, 5
      %s146 = smul.addr %s145, 2
      %s147 = smul.addr %s146, 8
      %s148 = scalar_lea.vmem %s2, %s147
      %p149 = scmp.lt.s32.totalorder %s13, 5
      %s150 = scalar_select %p149, %s13, 5
      %s151 = smul.addr %s150, 6
      %s152 = smul.addr %s151, 8
      %s153 = scalar_lea.vmem %s0, %s152
      %p154 = scmp.lt.s32.totalorder %s13, 5
      %s155 = scalar_select %p154, %s13, 5
      %s156 = smul.addr %s155, 6
      %s157 = smul.addr %s156, 8
      %s158 = scalar_lea.vmem %s1, %s157
      %p159 = scmp.lt.s32.totalorder %s13, 5
      %s160 = scalar_select %p159, %s13, 5
      %s161 = smul.addr %s160, 2
      %s162 = smul.addr %s161, 8
      %s163 = scalar_lea.vmem %s2, %s162
      %v164 = vld [vmem:[%s153] sm:$0xff]
      %v165 = vld [vmem:[%s153 + $0x8] sm:$0xff]
      %v166 = vld [vmem:[%s153 + $0x10] sm:$0xff]
      %v167 = vld [vmem:[%s153 + $0x18] sm:$0xff]
      %v168 = vld [vmem:[%s153 + $0x20] sm:$0x3]
      %v169 = vld [vmem:[%s153 + $0x28] sm:$0x3]
      %v170 = vld [vmem:[%s158] sm:$0xff]
      %v171 = vld [vmem:[%s158 + $0x8] sm:$0xff]
      %v172 = vld [vmem:[%s158 + $0x10] sm:$0xff]
      %v173 = vld [vmem:[%s158 + $0x18] sm:$0xff]
      %v174 = vld [vmem:[%s158 + $0x20] sm:$0x3]
      %v175 = vld [vmem:[%s158 + $0x28] sm:$0x3]
      %v176 = vsub.f32 %v164, %v170
      %v177 = vsub.f32 %v165, %v171
      %v178 = vsub.f32 %v166, %v172
      %v179 = vsub.f32 %v167, %v173
      %v180 = vsub.f32 %v168, %v174
      %v181 = vsub.f32 %v169, %v175
      %v182 = vmul.f32 %v176, 0.13533528
      %v183 = vmul.f32 %v177, 0.13533528
      %v184 = vmul.f32 %v178, 0.13533528
      %v185 = vmul.f32 %v179, 0.13533528
      %v186 = vmul.f32 %v180, 0.13533528
      %v187 = vmul.f32 %v181, 0.13533528
      %v188 = vld [vmem:[%s153] sm:$0xfe]
      %v189 = vld [vmem:[%s153 + $0x8] sm:$0xfe]
      %v190 = vld [vmem:[%s153 + $0x20] sm:$0x7]
      %v191 = vld [vmem:[%s153 + $0x28] sm:$0x7]
      %v192 = vld [vmem:[%s158] sm:$0xfe]
      %v193 = vld [vmem:[%s158 + $0x8] sm:$0xfe]
      %v194 = vld [vmem:[%s158 + $0x20] sm:$0x7]
      %v195 = vld [vmem:[%s158 + $0x28] sm:$0x7]
      %v196 = vsub.f32 %v188, %v192
      %v197 = vsub.f32 %v189, %v193
      %v198 = vsub.f32 %v190, %v194
      %v199 = vsub.f32 %v191, %v195
      %v200 = vmul.f32 %v196, 0.60653067
      %v201 = vmul.f32 %v197, 0.60653067
      %v202 = vmul.f32 %v178, 0.60653067
      %v203 = vmul.f32 %v179, 0.60653067
      %v204 = vmul.f32 %v198, 0.60653067
      %v205 = vmul.f32 %v199, 0.60653067
      %vm212 = vcmask 1046528
      %v213 = vrot.slane %v200, 1
      %v214 = vrot.slane %v202, 1
      %v215 = vsel %vm212, %v213, %v214
      %v216 = vrot.slane %v201, 1
      %v217 = vrot.slane %v203, 1
      %v218 = vsel %vm212, %v216, %v217
      %v219 = vrot.slane %v204, 1
      %v220 = vsel %vm212, %v214, %v219
      %v221 = vrot.slane %v205, 1
      %v222 = vsel %vm212, %v217, %v221
      %v229 = vadd.f32 %v182, %v215
      %v230 = vadd.f32 %v183, %v218
      %v231 = vadd.f32 %v184, %v220
      %v232 = vadd.f32 %v185, %v222
      %v233 = vadd.f32 %v186, %v219
      %v234 = vadd.f32 %v187, %v221
      %v235 = vld [vmem:[%s153] sm:$0xfc]
      %v236 = vld [vmem:[%s153 + $0x8] sm:$0xfc]
      %v237 = vld [vmem:[%s153 + $0x20] sm:$0xf]
      %v238 = vld [vmem:[%s153 + $0x28] sm:$0xf]
      %v239 = vld [vmem:[%s158] sm:$0xfc]
      %v240 = vld [vmem:[%s158 + $0x8] sm:$0xfc]
      %v241 = vld [vmem:[%s158 + $0x20] sm:$0xf]
      %v242 = vld [vmem:[%s158 + $0x28] sm:$0xf]
      %v243 = vsub.f32 %v235, %v239
      %v244 = vsub.f32 %v236, %v240
      %v245 = vsub.f32 %v237, %v241
      %v246 = vsub.f32 %v238, %v242
      %vm253 = vcmask 1045504
      %v254 = vrot.slane %v243, 2
      %v255 = vrot.slane %v178, 2
      %v256 = vsel %vm253, %v254, %v255
      %v257 = vrot.slane %v244, 2
      %v258 = vrot.slane %v179, 2
      %v259 = vsel %vm253, %v257, %v258
      %v260 = vrot.slane %v245, 2
      %v261 = vsel %vm253, %v255, %v260
      %v262 = vrot.slane %v246, 2
      %v263 = vsel %vm253, %v258, %v262
      %v270 = vadd.f32 %v229, %v256
      %v271 = vadd.f32 %v230, %v259
      %v272 = vadd.f32 %v231, %v261
      %v273 = vadd.f32 %v232, %v263
      %v274 = vadd.f32 %v233, %v260
      %v275 = vadd.f32 %v234, %v262
      %v276 = vld [vmem:[%s153] sm:$0xf8]
      %v277 = vld [vmem:[%s153 + $0x8] sm:$0xf8]
      %v278 = vld [vmem:[%s153 + $0x20] sm:$0x1f]
      %v279 = vld [vmem:[%s153 + $0x28] sm:$0x1f]
      %v280 = vld [vmem:[%s158] sm:$0xf8]
      %v281 = vld [vmem:[%s158 + $0x8] sm:$0xf8]
      %v282 = vld [vmem:[%s158 + $0x20] sm:$0x1f]
      %v283 = vld [vmem:[%s158 + $0x28] sm:$0x1f]
      %v284 = vsub.f32 %v276, %v280
      %v285 = vsub.f32 %v277, %v281
      %v286 = vsub.f32 %v278, %v282
      %v287 = vsub.f32 %v279, %v283
      %v288 = vmul.f32 %v284, 0.60653067
      %v289 = vmul.f32 %v285, 0.60653067
      %v290 = vmul.f32 %v286, 0.60653067
      %v291 = vmul.f32 %v287, 0.60653067
      %vm296 = vcmask 1044480
      %v297 = vrot.slane %v288, 3
      %v298 = vrot.slane %v202, 3
      %v299 = vsel %vm296, %v297, %v298
      %v300 = vrot.slane %v289, 3
      %v301 = vrot.slane %v203, 3
      %v302 = vsel %vm296, %v300, %v301
      %v303 = vrot.slane %v290, 3
      %v304 = vsel %vm296, %v298, %v303
      %v305 = vrot.slane %v291, 3
      %v306 = vsel %vm296, %v301, %v305
      %v313 = vadd.f32 %v270, %v299
      %v314 = vadd.f32 %v271, %v302
      %v315 = vadd.f32 %v272, %v304
      %v316 = vadd.f32 %v273, %v306
      %v317 = vadd.f32 %v274, %v303
      %v318 = vadd.f32 %v275, %v305
      %v319 = vmul.f32 %v313, 0.053990968
      %v320 = vmul.f32 %v314, 0.053990968
      %v321 = vmul.f32 %v315, 0.053990968
      %v322 = vmul.f32 %v316, 0.053990968
      %v323 = vmul.f32 %v317, 0.053990968
      %v324 = vmul.f32 %v318, 0.053990968
      %325 = vrot.lane.b32.xlu0 %v313, 127
      %v326 = vpop.permute.xlu0 %325
      %327 = vrot.lane.b32.xlu0 %v315, 127
      %v328 = vpop.permute.xlu0 %327
      %329 = vrot.lane.b32.xlu0 %v317, 127
      %v330 = vpop.permute.xlu0 %329
      %331 = vrot.lane.b32.xlu0 %v314, 127
      %v332 = vpop.permute.xlu0 %331
      %333 = vrot.lane.b32.xlu0 %v316, 127
      %v334 = vpop.permute.xlu0 %333
      %335 = vrot.lane.b32.xlu0 %v318, 127
      %v336 = vpop.permute.xlu0 %335
      %v337 = vlaneseq
      %v338 = vand.u32 %v337, 127
      %vm339 = vcmp.lt.s32.totalorder %v338, 127
      %v340 = vsel %vm339, %v326, %v332
      %v341 = vsel %vm339, %v328, %v334
      %v342 = vsel %vm339, %v330, %v336
      %v343 = vsel %vm339, %v332, %v326
      %v344 = vsel %vm339, %v334, %v328
      %v345 = vsel %vm339, %v336, %v330
      %v346 = vmul.f32 %v340, 0.24197072
      %v347 = vmul.f32 %v343, 0.24197072
      %v348 = vmul.f32 %v341, 0.24197072
      %v349 = vmul.f32 %v344, 0.24197072
      %v350 = vmul.f32 %v342, 0.24197072
      %v351 = vmul.f32 %v345, 0.24197072
      %v352 = vadd.f32 %v319, %v346
      %v353 = vadd.f32 %v320, %v347
      %v354 = vadd.f32 %v321, %v348
      %v355 = vadd.f32 %v322, %v349
      %v356 = vadd.f32 %v323, %v350
      %v357 = vadd.f32 %v324, %v351
      %358 = vrot.lane.b32.xlu0 %v313, 126
      %v359 = vpop.permute.xlu0 %358
      %360 = vrot.lane.b32.xlu0 %v315, 126
      %v361 = vpop.permute.xlu0 %360
      %362 = vrot.lane.b32.xlu0 %v317, 126
      %v363 = vpop.permute.xlu0 %362
      %364 = vrot.lane.b32.xlu0 %v314, 126
      %v365 = vpop.permute.xlu0 %364
      %366 = vrot.lane.b32.xlu0 %v316, 126
      %v367 = vpop.permute.xlu0 %366
      %368 = vrot.lane.b32.xlu0 %v318, 126
      %v369 = vpop.permute.xlu0 %368
      %vm370 = vcmp.lt.s32.totalorder %v338, 126
      %v371 = vsel %vm370, %v359, %v365
      %v372 = vsel %vm370, %v361, %v367
      %v373 = vsel %vm370, %v363, %v369
      %v374 = vsel %vm370, %v365, %v359
      %v375 = vsel %vm370, %v367, %v361
      %v376 = vsel %vm370, %v369, %v363
      %v377 = vmul.f32 %v371, 0.3989423
      %v378 = vmul.f32 %v374, 0.3989423
      %v379 = vmul.f32 %v372, 0.3989423
      %v380 = vmul.f32 %v375, 0.3989423
      %v381 = vmul.f32 %v373, 0.3989423
      %v382 = vmul.f32 %v376, 0.3989423
      %v383 = vadd.f32 %v352, %v377
      %v384 = vadd.f32 %v353, %v378
      %v385 = vadd.f32 %v354, %v379
      %v386 = vadd.f32 %v355, %v380
      %v387 = vadd.f32 %v356, %v381
      %v388 = vadd.f32 %v357, %v382
      %389 = vrot.lane.b32.xlu0 %v313, 125
      %v390 = vpop.permute.xlu0 %389
      %391 = vrot.lane.b32.xlu0 %v315, 125
      %v392 = vpop.permute.xlu0 %391
      %393 = vrot.lane.b32.xlu0 %v317, 125
      %v394 = vpop.permute.xlu0 %393
      %395 = vrot.lane.b32.xlu0 %v314, 125
      %v396 = vpop.permute.xlu0 %395
      %397 = vrot.lane.b32.xlu0 %v316, 125
      %v398 = vpop.permute.xlu0 %397
      %399 = vrot.lane.b32.xlu0 %v318, 125
      %v400 = vpop.permute.xlu0 %399
      %vm401 = vcmp.lt.s32.totalorder %v338, 125
      %v402 = vsel %vm401, %v390, %v396
      %v403 = vsel %vm401, %v392, %v398
      %v404 = vsel %vm401, %v394, %v400
      %v405 = vsel %vm401, %v396, %v390
      %v406 = vsel %vm401, %v398, %v392
      %v407 = vsel %vm401, %v400, %v394
      %v408 = vmul.f32 %v402, 0.24197072
      %v409 = vmul.f32 %v405, 0.24197072
      %v410 = vmul.f32 %v403, 0.24197072
      %v411 = vmul.f32 %v406, 0.24197072
      %v412 = vmul.f32 %v404, 0.24197072
      %v413 = vmul.f32 %v407, 0.24197072
      %v414 = vadd.f32 %v383, %v408
      %v415 = vadd.f32 %v384, %v409
      %v416 = vadd.f32 %v385, %v410
      %v417 = vadd.f32 %v386, %v411
      %v418 = vadd.f32 %v387, %v412
      %v419 = vadd.f32 %v388, %v413
      %420 = vrot.lane.b32.xlu0 %v414, 127
      %v421 = vpop.permute.xlu0 %420
      %422 = vrot.lane.b32.xlu0 %v416, 127
      %v423 = vpop.permute.xlu0 %422
      %424 = vrot.lane.b32.xlu0 %v418, 127
      %v425 = vpop.permute.xlu0 %424
      %426 = vrot.lane.b32.xlu0 %v415, 127
      %v427 = vpop.permute.xlu0 %426
      %428 = vrot.lane.b32.xlu0 %v417, 127
      %v429 = vpop.permute.xlu0 %428
      %430 = vrot.lane.b32.xlu0 %v419, 127
      %v431 = vpop.permute.xlu0 %430
      %v432 = vsel %vm339, %v421, %v427
      %v433 = vsel %vm339, %v423, %v429
      %v434 = vsel %vm339, %v425, %v431
      %435 = vrot.lane.b32.xlu0 %v414, 126
      %v436 = vpop.permute.xlu0 %435
      %437 = vrot.lane.b32.xlu0 %v416, 126
      %v438 = vpop.permute.xlu0 %437
      %439 = vrot.lane.b32.xlu0 %v418, 126
      %v440 = vpop.permute.xlu0 %439
      %441 = vrot.lane.b32.xlu0 %v415, 126
      %v442 = vpop.permute.xlu0 %441
      %443 = vrot.lane.b32.xlu0 %v417, 126
      %v444 = vpop.permute.xlu0 %443
      %445 = vrot.lane.b32.xlu0 %v419, 126
      %v446 = vpop.permute.xlu0 %445
      %v447 = vsel %vm370, %v436, %v442
      %v448 = vsel %vm370, %v438, %v444
      %v449 = vsel %vm370, %v440, %v446
      %v450 = vsub.f32 %v432, %v414
      %v451 = vsub.f32 %v433, %v416
      %v452 = vsub.f32 %v434, %v418
      %v453 = vsub.f32 %v432, %v447
      %v454 = vsub.f32 %v433, %v448
      %v455 = vsub.f32 %v434, %v449
      %vm458 = vcmask 1040384
      %v459 = vrot.slane %v432, 7
      %v460 = vrot.slane %v433, 7
      %v461 = vsel %vm458, %v459, %v460
      %v465 = vsub.f32 %v432, %v459
      %v466 = vsub.f32 %v433, %v461
      %v467 = vsub.f32 %v434, %v460
      %v469 = vrot.slane %v432, 1
      %v470 = vrot.slane %v433, 1
      %v471 = vsel %vm212, %v469, %v470
      %v472 = vrot.slane %v434, 1
      %v473 = vsel %vm212, %v470, %v472
      %v477 = vsub.f32 %v432, %v471
      %v478 = vsub.f32 %v433, %v473
      %v479 = vsub.f32 %v434, %v472
      %v480 = vmul.f32 %v450, %v450
      %v481 = vmul.f32 %v451, %v451
      %v482 = vmul.f32 %v452, %v452
      %v483 = vmul.f32 %v453, %v453
      %v484 = vmul.f32 %v454, %v454
      %v485 = vmul.f32 %v455, %v455
      %v486 = vadd.f32 %v480, %v483
      %v487 = vadd.f32 %v481, %v484
      %v488 = vadd.f32 %v482, %v485
      %v489 = vmul.f32 %v465, %v465
      %v490 = vmul.f32 %v466, %v466
      %v491 = vmul.f32 %v467, %v467
      %v492 = vadd.f32 %v486, %v489
      %v493 = vadd.f32 %v487, %v490
      %v494 = vadd.f32 %v488, %v491
      %v495 = vmul.f32 %v477, %v477
      %v496 = vmul.f32 %v478, %v478
      %v497 = vmul.f32 %v479, %v479
      %v498 = vadd.f32 %v492, %v495
      %v499 = vadd.f32 %v493, %v496
      %v500 = vadd.f32 %v494, %v497
      %501 = vst [vmem:[%s163 - $0x1] sm:$0xfe] %v498
      %502 = vst [vmem:[%s163 + $0x7] sm:$0xff] %v499
      %503 = vst [vmem:[%s163 + $0xf] sm:$0x1] %v500
      %p504 = scmp.lt.s32.totalorder %s13, 5
      %s505 = scalar_select %p504, %s13, 5
      %s506 = smul.addr %s505, 2
      %s507 = smul.addr %s506, 8
      %s508 = scalar_lea.vmem %s2, %s507
      // Predicated region
      $region29: #{l_spa.1} parent=27 // pred_check
        %p509 = pneg %p83
      $region30: #{l_spa.1} parent=27 // pred_check_branch
        %511 = sbr.rel (%p509) target = $region32
      $region31: #{l_spa.1} parent=27 // pred_region
        _
      $region32: #{l_spa.1} parent=27 // pred_fallthru
        _
    $region28: #{l_spa.1} parent=5 // pred_fallthru
      _
    %p512 = scmp.le.s32.totalorder 2, %s8
    // Predicated region
    $region33: #{l_spa.1} parent=5 // pred_check
      %p513 = pneg %p512
    $region34: #{l_spa.1} parent=5 // pred_check_branch
      %515 = sbr.rel (%p513) target = $region36
    $region35: #{l_spa.1} parent=5 // pred_region
      %s516 = ssub.s32 %s8, 2
      // Predicated region
      $region37: #{l_spa.1} parent=35 // pred_check
        %p517 = pneg %p89
      $region38: #{l_spa.1} parent=35 // pred_check_branch
        %519 = sbr.rel (%p517) target = $region40
      $region39: #{l_spa.1} parent=35 // pred_region
        %p520 = scmp.lt.s32.totalorder %s14, 5
        %s521 = scalar_select %p520, %s14, 5
        %s522 = smul.addr %s521, 2
        %s523 = smul.addr %s522, 8
        %s524 = scalar_lea.vmem %s2, %s523
      $region40: #{l_spa.1} parent=35 // pred_fallthru
        _
    $region36: #{l_spa.1} parent=5 // pred_fallthru
      _
  $region6: #{l_spa.1} parent=0 // loop_footer
    %s12 = sadd.s32 1, %s8
  $region7: #{l_spa.1} parent=0 // loop_footer_branch
    %7 = sbr.rel target = $region3
  $region8: #{l_spa.1} parent=0 // loop_exit
    _

</llo_original>
